<compile_context>
chip_gen: v6e
topology: v6e:2x2x1
jax: 0.10.0
libtpu: 0.0.40
codegen_flags: <defaults>
</compile_context>

<pallas_src>
import jax
import jax.numpy as jnp
import numpy as np
from jax.experimental import pallas as pl
from jax.experimental.pallas import tpu as pltpu


def _round_up(x, m):
    return (x + m - 1) // m * m


def _pick_tile(dim_padded, target, gran):
    """Largest multiple of `gran` that is <= target and divides dim_padded."""
    t = min(target, dim_padded)
    t = max((t // gran) * gran, gran)
    while dim_padded % t != 0:
        t -= gran
    return t


def _linear_kernel(x_ref, w_ref, b_ref, o_ref, acc_ref):
    k = pl.program_id(2)

    @pl.when(k == 0)
    def _init():
        # Fold the bias into the accumulator init (f32); added exactly once.
        acc_ref[...] = jnp.broadcast_to(b_ref[...], acc_ref.shape)

    # Native MXU path: lhs (tm, tk) x rhs (tk, tn), f32 accumulation.
    acc_ref[...] += jnp.dot(x_ref[...], w_ref[...],
                            preferred_element_type=jnp.float32)

    @pl.when(k == pl.num_programs(2) - 1)
    def _finalize():
        o_ref[...] = acc_ref[...].astype(o_ref.dtype)


def prepare_linear_params(weight, bias, *, compute_dtype=jnp.bfloat16):
    """One-time weight prep: transpose to (C_in, C_out), pad to (128,128) multiples,
    cast the weight to bf16 and the bias to f32. Cache the result across calls."""
    C_out, C_in = weight.shape
    Kp = _round_up(C_in, 128)
    Np = _round_up(C_out, 128)
    wt = jnp.pad(weight.T, ((0, Kp - C_in), (0, Np - C_out))).astype(compute_dtype)
    bp = jnp.pad(bias, (0, Np - C_out)).reshape(1, Np).astype(jnp.float32)
    return wt, bp, C_out


def linear_fc_prepared(x, wt, bp, out_features, *, compute_dtype=jnp.bfloat16,
                       tm=None, tn=None, tk=None):
    """y = x @ W^T + b with pre-prepared (transposed/padded/bf16) weight.
    x: (B, C_in), wt: (Kp, Np) bf16, bp: (1, Np) f32."""
    B, C_in = x.shape
    Kp, Np = wt.shape
    assert C_in <= Kp and out_features <= Np
    out_dtype = x.dtype

    # Pad only to layout granularity (16 sublanes for bf16 M, 128 lanes for K).
    Bp = _round_up(B, 16)
    xp = jnp.pad(x, ((0, Bp - B), (0, Kp - C_in))).astype(compute_dtype)

    # Large, lane-dense tiles that divide the padded dims exactly.
    if tm is None:
        tm = _pick_tile(Bp, 512, 16)
    if tn is None:
        tn = _pick_tile(Np, 512, 128)
    if tk is None:
        tk = _pick_tile(Kp, 1024, 128)

    # v7x has 2 TensorCores: make sure the parallel (M, N) grid has >= 2 blocks
    # when the problem is big enough, so one core doesn't idle.
    if (Bp // tm) * (Np // tn) < 2:
        if Np // 128 >= 2:
            tn = _pick_tile(Np, max(tn // 2, 128), 128)
        elif Bp // 16 >= 2:
            tm = _pick_tile(Bp, max(tm // 2, 16), 16)

    grid = (Bp // tm, Np // tn, Kp // tk)

    csize = jnp.dtype(compute_dtype).itemsize
    osize = jnp.dtype(out_dtype).itemsize
    # Double-buffered inputs/outputs + resident f32 accumulator.
    footprint = (2 * (tm * tk + tk * tn) * csize
                 + 2 * tn * 4
                 + 2 * tm * tn * osize
                 + tm * tn * 4)
    # Never below the 32 MB compiler default; cap at 48 MB (v7x has 64 MB physical).
    vmem_limit = int(min(max(32 * 1024 * 1024, 2 * footprint), 48 * 1024 * 1024))

    cost = pl.CostEstimate(
        flops=2 * Bp * Kp * Np,
        transcendentals=0,
        bytes_accessed=(Bp * Kp + Kp * Np) * csize + Np * 4 + Bp * Np * osize,
    )

    out_padded = pl.pallas_call(
        _linear_kernel,
        out_shape=jax.ShapeDtypeStruct((Bp, Np), out_dtype),
        grid_spec=pltpu.PrefetchScalarGridSpec(
            num_scalar_prefetch=0,
            grid=grid,
            in_specs=[
                pl.BlockSpec((tm, tk), lambda i, j, k: (i, k)),   # x
                pl.BlockSpec((tk, tn), lambda i, j, k: (k, j)),   # W^T (C_in, C_out)
                pl.BlockSpec((1, tn), lambda i, j, k: (0, j)),    # bias row (k-invariant)
            ],
            out_specs=pl.BlockSpec((tm, tn), lambda i, j, k: (i, j)),
            scratch_shapes=[pltpu.VMEM((tm, tn), jnp.float32)],
        ),
        compiler_params=pltpu.CompilerParams(
            dimension_semantics=("parallel", "parallel", "arbitrary"),
            vmem_limit_bytes=vmem_limit,
        ),
        cost_estimate=cost,
    )(xp, wt, bp)

    return out_padded[:B, :out_features]


def linear_fc(x, weight, bias, *, compute_dtype=jnp.bfloat16, **tile_kwargs):
    """Convenience wrapper: y = x @ W^T + b from raw torch-layout params.
    For repeated calls, call prepare_linear_params once and reuse its output."""
    wt, bp, out_features = prepare_linear_params(weight, bias,
                                                 compute_dtype=compute_dtype)
    return linear_fc_prepared(x, wt, bp, out_features,
                              compute_dtype=compute_dtype, **tile_kwargs)


def init_linear_params(key, in_channels, out_channels):
    """Deterministic init mirroring torch nn.Linear default (uniform +/- 1/sqrt(in))."""
    kw, kb = jax.random.split(key)
    bound = 1.0 / np.sqrt(in_channels)
    weight = jax.random.uniform(kw, (out_channels, in_channels),
                                dtype=jnp.float32, minval=-bound, maxval=bound)
    bias = jax.random.uniform(kb, (out_channels,),
                              dtype=jnp.float32, minval=-bound, maxval=bound)
    return weight, bias


if __name__ == "__main__":
    key = jax.random.PRNGKey(0)
    k_x, k_p = jax.random.split(key)

    batch = 8
    in_channels = 32
    out_channels = 16

    x = jax.random.normal(k_x, (batch, in_channels), dtype=jnp.float32)
    weight, bias = init_linear_params(k_p, in_channels, out_channels)

    # Prepare once (cacheable), then run the kernel.
    wt, bp, n_out = prepare_linear_params(weight, bias)
    out = linear_fc_prepared(x, wt, bp, n_out)
    out = jax.block_until_ready(out)
    assert out.shape == (batch, out_channels)

    # Reference uses the same bf16-rounded operands with f32 accumulation.
    xq = x.astype(jnp.bfloat16).astype(jnp.float32)
    wq = weight.astype(jnp.bfloat16).astype(jnp.float32)
    ref = xq @ wq.T + bias
    np.testing.assert_allclose(np.asarray(out), np.asarray(ref),
                               rtol=1e-3, atol=1e-3)
    print("KERNEL_OK")
</pallas_src>

<mosaic_0001>
module attributes {stable_mosaic.version = 11 : i64} {
  func.func @_linear_kernel(%arg0: i32, %arg1: i32, %arg2: i32, %arg3: memref<16x128xbf16, #tpu.memory_space<vmem>>, %arg4: memref<128x128xbf16, #tpu.memory_space<vmem>>, %arg5: memref<1x128xf32, #tpu.memory_space<vmem>>, %arg6: memref<16x128xf32, #tpu.memory_space<vmem>>, %arg7: memref<16x128xf32, #tpu.memory_space<vmem>>) attributes {dimension_semantics = [#tpu.dimension_semantics<parallel>, #tpu.dimension_semantics<parallel>, #tpu.dimension_semantics<arbitrary>], iteration_bounds = array<i64: 1, 1, 1>, scalar_prefetch = 0 : i64, scratch_operands = 1 : i64, tpu.core_type = #tpu.core_type<tc>, window_params = [{transform_indices = @transform_0, window_bounds = array<i64: 16, 128>}, {transform_indices = @transform_1, window_bounds = array<i64: 128, 128>}, {transform_indices = @transform_2, window_bounds = array<i64: 1, 128>}, {transform_indices = @transform_3, window_bounds = array<i64: 16, 128>}]} {
    %c0_i32 = arith.constant 0 : i32
    %0 = arith.cmpi eq, %arg2, %c0_i32 : i32
    %1 = arith.extui %0 : i1 to i32
    %c0_i32_0 = arith.constant 0 : i32
    %2 = arith.cmpi ne, %1, %c0_i32_0 : i32
    scf.if %2 {
      %c0_10 = arith.constant 0 : index
      %c0_11 = arith.constant 0 : index
      %12 = vector.load %arg5[%c0_10, %c0_11] : memref<1x128xf32, #tpu.memory_space<vmem>>, vector<1x128xf32>
      %13 = vector.shape_cast %12 : vector<1x128xf32> to vector<1x128xf32>
      %14 = vector.broadcast %13 : vector<1x128xf32> to vector<16x128xf32>
      %c0_12 = arith.constant 0 : index
      %c0_13 = arith.constant 0 : index
      %15 = vector.load %arg7[%c0_12, %c0_13] : memref<16x128xf32, #tpu.memory_space<vmem>>, vector<16x128xf32>
      tpu.vector_store %arg7[%c0_12, %c0_13], %14 {strides = array<i32>} : memref<16x128xf32, #tpu.memory_space<vmem>>, vector<16x128xf32>,
    } else {
    }
    %c0 = arith.constant 0 : index
    %c0_1 = arith.constant 0 : index
    %3 = vector.load %arg7[%c0, %c0_1] : memref<16x128xf32, #tpu.memory_space<vmem>>, vector<16x128xf32>
    %c0_2 = arith.constant 0 : index
    %c0_3 = arith.constant 0 : index
    %4 = vector.load %arg3[%c0_2, %c0_3] : memref<16x128xbf16, #tpu.memory_space<vmem>>, vector<16x128xbf16>
    %c0_4 = arith.constant 0 : index
    %c0_5 = arith.constant 0 : index
    %5 = vector.load %arg4[%c0_4, %c0_5] : memref<128x128xbf16, #tpu.memory_space<vmem>>, vector<128x128xbf16>
    %cst = arith.constant dense<0.000000e+00> : vector<16x128xf32>
    %6 = tpu.matmul %4, %5, %cst {dimension_numbers = #tpu.dot_dimension_numbers<[1], [0], [0], [1], [0, 0, 1, 1], [], []>} : vector<16x128xbf16>, vector<128x128xbf16>, vector<16x128xf32> -> vector<16x128xf32>
    %7 = arith.addf %3, %6 : vector<16x128xf32>
    %c0_6 = arith.constant 0 : index
    %c0_7 = arith.constant 0 : index
    %8 = vector.load %arg7[%c0_6, %c0_7] : memref<16x128xf32, #tpu.memory_space<vmem>>, vector<16x128xf32>
    tpu.vector_store %arg7[%c0_6, %c0_7], %7 {strides = array<i32>} : memref<16x128xf32, #tpu.memory_space<vmem>>, vector<16x128xf32>,
    %c0_i32_8 = arith.constant 0 : i32
    %9 = arith.cmpi eq, %arg2, %c0_i32_8 : i32
    %10 = arith.extui %9 : i1 to i32
    %c0_i32_9 = arith.constant 0 : i32
    %11 = arith.cmpi ne, %10, %c0_i32_9 : i32
    scf.if %11 {
      %c0_10 = arith.constant 0 : index
      %c0_11 = arith.constant 0 : index
      %12 = vector.load %arg7[%c0_10, %c0_11] : memref<16x128xf32, #tpu.memory_space<vmem>>, vector<16x128xf32>
      %c0_12 = arith.constant 0 : index
      %c0_13 = arith.constant 0 : index
      %13 = vector.load %arg6[%c0_12, %c0_13] : memref<16x128xf32, #tpu.memory_space<vmem>>, vector<16x128xf32>
      tpu.vector_store %arg6[%c0_12, %c0_13], %12 {strides = array<i32>} : memref<16x128xf32, #tpu.memory_space<vmem>>, vector<16x128xf32>,
    } else {
    }
    return
  }
  func.func @transform_0(%arg0: i32, %arg1: i32, %arg2: i32) -> (i32, i32) {
    %c0_i32 = arith.constant 0 : i32
    return %arg0, %arg2 : i32, i32
  }
  func.func @transform_1(%arg0: i32, %arg1: i32, %arg2: i32) -> (i32, i32) {
    %c0_i32 = arith.constant 0 : i32
    return %arg2, %arg1 : i32, i32
  }
  func.func @transform_2(%arg0: i32, %arg1: i32, %arg2: i32) -> (i32, i32) {
    %c0_i32 = arith.constant 0 : i32
    %c0_i32_0 = arith.constant 0 : i32
    return %c0_i32, %arg1 : i32, i32
  }
  func.func @transform_3(%arg0: i32, %arg1: i32, %arg2: i32) -> (i32, i32) {
    %c0_i32 = arith.constant 0 : i32
    return %arg0, %arg1 : i32, i32
  }
}

</mosaic_0001>

<llo_original>
// kernel: tpu_custom_call.1
$region0: #{tpu_custom_call.1}
  #allocation0 [shape = 'u32[]', space=smem, size = 0x4, offset = 0x4, fixed_abs, tag = 'smem constant byte address 0x4 - core index']
  #allocation1 [shape = 'u32[144,128]{1,0:T(1,128)}', space=vmem, size = 0x12000, scoped, tag = 'internal scratch']
  #allocation2 [shape = 'f32[16,128]{1,0:T(8,128)}', space=vmem, size = 0x2000, scoped, tag = 'scratch operand']
  %s0 = inlined_call_operand.hbm [shape: bf16[16,128], index: 0, kind: input, shape index: {}]
  %s1 = inlined_call_operand.hbm [shape: bf16[128,128], index: 1, kind: input, shape index: {}]
  %s2 = inlined_call_operand.vmem [shape: f32[1,128], index: 2, kind: input, shape index: {}]
  %s3 = inlined_call_operand.hbm [shape: f32[16,128], index: 3, kind: output, shape index: {}]
  %s4 = sld [smem:[#allocation0]]
  $region38: #{tpu_custom_call.1} parent=0
    _
  %s6 = ssub.s32 1, %s4
  %s7 = scalar_select 0, %s6, %s4
  $region1: #{tpu_custom_call.1} parent=0
    #allocation3 [shape = 'u8[4096]{0}', space=vmem, size = 0x1000, scoped, tag = 'input window, operand 0, single buffered']
    #allocation4 [shape = 's32[1]{0}', space=sflag, size = 0x4, scoped, tag = 'scoped memory for tpu_custom_call.1']
    #allocation5 [shape = 's32[1]{0}', space=sflag, size = 0x4, scoped, tag = 'scoped memory for tpu_custom_call.1']
    #allocation6 [shape = 'u8[32768]{0}', space=vmem, size = 0x8000, scoped, tag = 'input window, operand 1, single buffered']
    #allocation7 [shape = 's32[1]{0}', space=sflag, size = 0x4, scoped, tag = 'scoped memory for tpu_custom_call.1']
    #allocation8 [shape = 'u8[8192]{0}', space=vmem, size = 0x2000, scoped, tag = 'output window, operand 0, single buffered']
    %8 = vsyncpa [#allocation4], 0
    %9 = vsyncpa [#allocation7], 0
    %10 = vsyncpa [#allocation5], 0
    // Predicated region
    $region2: #{tpu_custom_call.1} parent=1 // pred_check
      _
    $region3: #{tpu_custom_call.1} parent=1 // pred_check_branch
      %12 = sbr.rel (0) target = $region5
    $region4: #{tpu_custom_call.1} parent=1 // pred_region
      %s14 = ssub.s32 128, 128
      %15 = vsyncadd [#allocation4], %s14
      %s16 = sshll.u32 [#allocation3], 4
      %s17 = int_to_ptr.vmem [resolvable:$true] %s16
      %22 = dma.hbm_to_vmem [thread:$0]  %s0, 128, %s17, [#allocation4], 64, 64, 4
    $region5: #{tpu_custom_call.1} parent=1 // pred_fallthru
      _
    // Predicated region
    $region6: #{tpu_custom_call.1} parent=1 // pred_check
      _
    $region7: #{tpu_custom_call.1} parent=1 // pred_check_branch
      %24 = sbr.rel (0) target = $region9
    $region8: #{tpu_custom_call.1} parent=1 // pred_region
      %s26 = ssub.s32 1024, 1024
      %27 = vsyncadd [#allocation7], %s26
      %s28 = sshll.u32 [#allocation6], 4
      %s29 = int_to_ptr.vmem [resolvable:$true] %s28
      %34 = dma.hbm_to_vmem [thread:$0]  %s1, 1024, %s29, [#allocation7], 64, 64, 4
    $region9: #{tpu_custom_call.1} parent=1 // pred_fallthru
      _
    // Predicated region
    $region10: #{tpu_custom_call.1} parent=1 // pred_check
      _
    $region11: #{tpu_custom_call.1} parent=1 // pred_check_branch
      %36 = sbr.rel (0) target = $region13
    $region12: #{tpu_custom_call.1} parent=1 // pred_region
      _
    $region13: #{tpu_custom_call.1} parent=1 // pred_fallthru
      _
    // Predicated region
    $region14: #{tpu_custom_call.1} parent=1 // pred_check
      _
    $region15: #{tpu_custom_call.1} parent=1 // pred_check_branch
      %38 = sbr.rel (0) target = $region17
    $region16: #{tpu_custom_call.1} parent=1 // pred_region
      %39 = dma.done [#allocation4], 128
    $region17: #{tpu_custom_call.1} parent=1 // pred_fallthru
      _
    // Predicated region
    $region18: #{tpu_custom_call.1} parent=1 // pred_check
      _
    $region19: #{tpu_custom_call.1} parent=1 // pred_check_branch
      %41 = sbr.rel (0) target = $region21
    $region20: #{tpu_custom_call.1} parent=1 // pred_region
      %42 = dma.done [#allocation7], 1024
    $region21: #{tpu_custom_call.1} parent=1 // pred_fallthru
      _
    %p44 = scmp.eq.s32.totalorder 0, 0
    // Predicated region
    $region22: #{tpu_custom_call.1} parent=1 // pred_check
      %p45 = pneg %p44
    $region23: #{tpu_custom_call.1} parent=1 // pred_check_branch
      %47 = sbr.rel (%p45) target = $region25
    $region24: #{tpu_custom_call.1} parent=1 // pred_region
      %v48 = vld [vmem:[%s2] sm:$0x1]
      %v50 = vlaneseq
      %v51 = vshrl.u32 %v50, 7
      %v52 = vsub.s32 0, %v51
      %v53 = vrot.slane %v48, %v52
      %55 = vst [vmem:[#allocation2] sm:$0xff] %v53
      %56 = vst [vmem:[#allocation2 + $0x8] sm:$0xff] %v53
    $region25: #{tpu_custom_call.1} parent=1 // pred_fallthru
      _
    %v57 = vld [vmem:[#allocation2] sm:$0xff]
    %v58 = vld [vmem:[#allocation2 + $0x8] sm:$0xff]
    %v59 = vld [vmem:[#allocation3] sm:$0xf]
    %v60 = vld [vmem:[#allocation3 + $0x4] sm:$0xf]
    %v61 = vld [vmem:[#allocation6] sm:$0xf]
    %v62 = vld [vmem:[#allocation6 + $0x4] sm:$0xf]
    %v63 = vld [vmem:[#allocation6 + $0x8] sm:$0xf]
    %v64 = vld [vmem:[#allocation6 + $0xc] sm:$0xf]
    %v65 = vld [vmem:[#allocation6 + $0x10] sm:$0xf]
    %v66 = vld [vmem:[#allocation6 + $0x14] sm:$0xf]
    %v67 = vld [vmem:[#allocation6 + $0x18] sm:$0xf]
    %v68 = vld [vmem:[#allocation6 + $0x1c] sm:$0xf]
    %v69 = vld [vmem:[#allocation6 + $0x20] sm:$0xf]
    %v70 = vld [vmem:[#allocation6 + $0x24] sm:$0xf]
    %v71 = vld [vmem:[#allocation6 + $0x28] sm:$0xf]
    %v72 = vld [vmem:[#allocation6 + $0x2c] sm:$0xf]
    %v73 = vld [vmem:[#allocation6 + $0x30] sm:$0xf]
    %v74 = vld [vmem:[#allocation6 + $0x34] sm:$0xf]
    %v75 = vld [vmem:[#allocation6 + $0x38] sm:$0xf]
    %v76 = vld [vmem:[#allocation6 + $0x3c] sm:$0xf]
    %v79 = vunpack.c.l.b16 %v59
    %v80 = vunpack.c.l.b16 %v60
    %v81 = vpack.c.b16 %v80, %v79
    %v99 = vunpack.c.l.b16 %v61
    %v100 = vunpack.c.l.b16 %v62
    %v101 = vunpack.c.l.b16 %v63
    %v102 = vunpack.c.l.b16 %v64
    %v103 = vunpack.c.l.b16 %v65
    %v104 = vunpack.c.l.b16 %v66
    %v105 = vunpack.c.l.b16 %v67
    %v106 = vunpack.c.l.b16 %v68
    %v107 = vunpack.c.l.b16 %v69
    %v108 = vunpack.c.l.b16 %v70
    %v109 = vunpack.c.l.b16 %v71
    %v110 = vunpack.c.l.b16 %v72
    %v111 = vunpack.c.l.b16 %v73
    %v112 = vunpack.c.l.b16 %v74
    %v113 = vunpack.c.l.b16 %v75
    %v114 = vunpack.c.l.b16 %v76
    %v115 = vpack.c.b16 %v100, %v99
    %v116 = vpack.c.b16 %v102, %v101
    %v117 = vpack.c.b16 %v104, %v103
    %v118 = vpack.c.b16 %v106, %v105
    %v119 = vpack.c.b16 %v108, %v107
    %v120 = vpack.c.b16 %v110, %v109
    %v121 = vpack.c.b16 %v112, %v111
    %v122 = vpack.c.b16 %v114, %v113
    %131 = vmatprep.subr.bf16.mxu0 0
    %132 = vmatpush1.bf16.msra.mxu0 %v122
    %133 = vmatprep.subr.bf16.mxu0 0
    %134 = vmatpush1.bf16.msra.mxu0 %v121
    %135 = vmatprep.subr.bf16.mxu0 0
    %136 = vmatpush1.bf16.msra.mxu0 %v120
    %137 = vmatprep.subr.bf16.mxu0 0
    %138 = vmatpush1.bf16.msra.mxu0 %v119
    %139 = vmatprep.subr.bf16.mxu0 0
    %140 = vmatpush1.bf16.msra.mxu0 %v118
    %141 = vmatprep.subr.bf16.mxu0 0
    %142 = vmatpush1.bf16.msra.mxu0 %v117
    %143 = vmatprep.subr.bf16.mxu0 0
    %144 = vmatpush1.bf16.msra.mxu0 %v116
    %145 = vmatprep.subr.bf16.mxu0 0
    %146 = vmatpush1.bf16.msra.mxu0 %v115
    %147 = vmatprep.subr.bf16.mxu0 0
    %148 = vmatpush2.bf16.msra.mxu0 0
    %149 = vmatprep.subr.bf16.mxu0 0
    %150 = vmatpush2.bf16.msra.mxu0 0
    %151 = vmatprep.subr.bf16.mxu0 0
    %152 = vmatpush2.bf16.msra.mxu0 0
    %153 = vmatprep.subr.bf16.mxu0 0
    %154 = vmatpush2.bf16.msra.mxu0 0
    %155 = vmatprep.subr.bf16.mxu0 0
    %156 = vmatpush2.bf16.msra.mxu0 0
    %157 = vmatprep.subr.bf16.mxu0 0
    %158 = vmatpush2.bf16.msra.mxu0 0
    %159 = vmatprep.subr.bf16.mxu0 0
    %160 = vmatpush2.bf16.msra.mxu0 0
    %161 = vmatprep.subr.bf16.mxu0 0
    %162 = vmatpush2.bf16.msra.mxu0 0
    %163 = vmatprep.mubr.bf16.mxu0 0
    %164 = vmatmul.mubr.bf16.gmra.mxu0 %v81
    %v165 = vpop.f32.mrf.mxu0
    %v166 = vadd.f32 0.0, %v165
    %v167 = vpop.f32.mrf.mxu0
    %v168 = vpop.f32.mrf.mxu0
    %v169 = vadd.f32 0.0, %v168
    %v170 = vpop.f32.mrf.mxu0
    %171 = vdwg.mxu0
    %v172 = vadd.f32 %v57, %v166
    %v173 = vadd.f32 %v58, %v169
    %174 = vst [vmem:[#allocation2] sm:$0xff] %v172
    %175 = vst [vmem:[#allocation2 + $0x8] sm:$0xff] %v173
    // Predicated region
    $region26: #{tpu_custom_call.1} parent=1 // pred_check
      %p176 = pneg %p44
    $region27: #{tpu_custom_call.1} parent=1 // pred_check_branch
      %178 = sbr.rel (%p176) target = $region29
    $region28: #{tpu_custom_call.1} parent=1 // pred_region
      %v179 = vld [vmem:[#allocation2] sm:$0xff]
      %v180 = vld [vmem:[#allocation2 + $0x8] sm:$0xff]
      %181 = vst [vmem:[#allocation8] sm:$0xff] %v179
      %182 = vst [vmem:[#allocation8 + $0x8] sm:$0xff] %v180
    $region29: #{tpu_custom_call.1} parent=1 // pred_fallthru
      _
    // Predicated region
    $region30: #{tpu_custom_call.1} parent=1 // pred_check
      _
    $region31: #{tpu_custom_call.1} parent=1 // pred_check_branch
      %184 = sbr.rel (0) target = $region33
    $region32: #{tpu_custom_call.1} parent=1 // pred_region
      %s186 = ssub.s32 256, 256
      %187 = vsyncadd [#allocation5], %s186
      %s188 = sshll.u32 [#allocation8], 4
      %s189 = int_to_ptr.vmem [resolvable:$true] %s188
      %194 = dma.vmem_to_hbm [thread:$0]  %s189, 256, %s3, [#allocation5], 128, 128, 8
    $region33: #{tpu_custom_call.1} parent=1 // pred_fallthru
      _
    // Predicated region
    $region34: #{tpu_custom_call.1} parent=1 // pred_check
      _
    $region35: #{tpu_custom_call.1} parent=1 // pred_check_branch
      %196 = sbr.rel (0) target = $region37
    $region36: #{tpu_custom_call.1} parent=1 // pred_region
      %197 = dma.done [#allocation5], 256
    $region37: #{tpu_custom_call.1} parent=1 // pred_fallthru
      _
    %198 = vsyncpa [#allocation4], 1
    %199 = vsyncpa [#allocation7], 1
    %200 = vsyncpa [#allocation5], 1

</llo_original>
